<compile_context>
chip_gen: v5e
topology: v5e:2x2
jax: 0.10.0
libtpu: 0.0.40
codegen_flags: <defaults>
</compile_context>

<pallas_src>
import functools
import math

import jax
import jax.numpy as jnp
from jax import lax
from jax.experimental import pallas as pl
from jax.experimental.pallas import tpu as pltpu

EPS = 1e-5


@functools.cache
def _roll_fwd_factor():
    """Pin pltpu.roll's rotation convention with a one-time eager probe.

    Returns f in {-1, +1} such that, for a 2-D array `a` with n lanes and static s,
        pltpu.roll(a, (f * s) % n, axis=1)[:, p] == a[:, (p + s) % n].
    (np.roll-style semantics give f = -1.)  Called once from __main__ *before* jit
    tracing so the cached Python int is available statically inside the kernel.
    """
    def probe(x_ref, o_ref):
        o_ref[...] = pltpu.roll(x_ref[...], 1, axis=1)

    x = lax.broadcasted_iota(jnp.float32, (8, 256), 1)
    y = pl.pallas_call(probe, out_shape=jax.ShapeDtypeStruct((8, 256), jnp.float32))(x)
    return -1 if float(y[0, 1]) == 0.0 else 1


def resblock_kernel(x_ref, t_ref,
                    g1_ref, b1_ref,
                    w1_ref, wt_ref, tb1_ref,
                    g2_ref, b2_ref,
                    w2_ref, wr_ref, bias2_ref,
                    o_ref, *, H, W, roll_fwd):
    N, Cin, HW = x_ref.shape
    Cout = o_ref.shape[1]
    NHW = N * HW
    inv_cnt = 1.0 / NHW

    # ---- whole batch as ONE lane-dense (C, N*HW) slab --------------------------------
    # HW (=256) is a multiple of 128, so this lane concat and the per-image stores at
    # the end are plain vreg-tile placements (no cross-lane repacking).
    x = jnp.concatenate([x_ref[n] for n in range(N)], axis=1)            # (Cin, NHW) f32

    # Per-lane (row, col) inside its own image; drives the 3x3 boundary masks and the
    # per-image time-embedding broadcast.  Computed once, reused by both convs.
    pos = lax.broadcasted_iota(jnp.int32, (1, NHW), 1)
    col = pos % W
    row = (pos % HW) // W
    mask_l, mask_r = col >= 1, col <= W - 2
    mask_t, mask_b = row >= 1, row <= H - 2
    tap_masks = {}
    for oy in (-1, 0, 1):
        for ox in (-1, 0, 1):
            if (oy, ox) == (0, 0):
                continue
            m = {-1: mask_t, 0: None, 1: mask_b}[oy]
            mh = {-1: mask_l, 0: None, 1: mask_r}[ox]
            if m is None:
                m = mh
            elif mh is not None:
                m = jnp.logical_and(m, mh)
            tap_masks[(oy, ox)] = m

    def conv3x3(y_taps):
        # y_taps: (9*Cout, NHW) f32 — one matmul's worth of per-tap partial products
        # W_tap @ act evaluated at the *source* pixel (tap-major rows).  Shift each
        # tap's slab onto its destination pixel with one XLU lane rotate, zero lanes
        # whose source lies outside the image (this also kills cross-image bleed and
        # wraparound of the fused slab), and accumulate.  Every row slice is 8-row
        # (f32 tile) aligned; no im2col, no sublane concat.
        acc = y_taps[4 * Cout:5 * Cout, :]                  # centre tap: no shift/mask
        i = 0
        for oy in (-1, 0, 1):
            for ox in (-1, 0, 1):
                if (oy, ox) != (0, 0):
                    s = oy * W + ox                          # destination p reads source p + s
                    yt = y_taps[i * Cout:(i + 1) * Cout, :]
                    yt = pltpu.roll(yt, (roll_fwd * s) % NHW, axis=1)
                    acc = acc + jnp.where(tap_masks[(oy, ox)], yt, 0.0)
                i += 1
        return acc

    def batchnorm(v, g, b):
        # One-pass biased batch statistics over (N, H, W); clamp the variance so the
        # E[x^2] - E[x]^2 cancellation can never feed a negative value to rsqrt.
        s = jnp.sum(v, axis=1, keepdims=True)
        ss = jnp.sum(v * v, axis=1, keepdims=True)
        mean = s * inv_cnt
        var = jnp.maximum(ss * inv_cnt - mean * mean, 0.0)
        scale = g * lax.rsqrt(var + EPS)
        return v * scale + (b - mean * scale)

    def silu(v):
        return v * jax.nn.sigmoid(v)

    # ---- BN1 + SiLU + conv1 (one (9*Cout, Cin) @ (Cin, NHW) MXU matmul) ---------------
    h = silu(batchnorm(x, g1_ref[...], b1_ref[...]))
    y1 = conv3x3(jnp.dot(w1_ref[...], h, preferred_element_type=jnp.float32))

    # ---- conv1 bias + Linear(SiLU(time)), one per-image broadcast add -----------------
    temb = (jnp.dot(wt_ref[...], silu(t_ref[...]),
                    preferred_element_type=jnp.float32) + tb1_ref[...])   # (Cout, N)
    bias1 = temb[:, 0:1]
    for n in range(1, N):
        bias1 = jnp.where(pos >= n * HW, temb[:, n:n + 1], bias1)
    y1 = y1 + bias1

    # ---- BN2 + SiLU; Dropout(p=0.0) is the identity ------------------------------------
    # TODO(synk): nn.Dropout with p > 0 (stateful RNG mask) is not implemented; the
    #             module default p = 0.0 makes it an identity here.
    z = silu(batchnorm(y1, g2_ref[...], b2_ref[...]))

    # ---- conv2 (one matmul) + f32 residual 1x1 conv + fused conv2/residual bias -------
    out = conv3x3(jnp.dot(w2_ref[...], z, preferred_element_type=jnp.float32))
    out = out + jnp.dot(wr_ref[...], x, preferred_element_type=jnp.float32)
    out = out + bias2_ref[...]

    for n in range(N):
        o_ref[n] = out[:, n * HW:(n + 1) * HW].astype(o_ref.dtype)


def prepare_resblock_params(params):
    """One-time parameter repacking, hoisted out of the forward path."""
    (g1, b1, w1_hwio, cb1, wt, bt, g2, b2, w2_hwio, cb2, wr, br) = params
    Cin, Cout = w1_hwio.shape[2], w1_hwio.shape[3]
    # Tap-major stacked conv weights: rows [i*Cout:(i+1)*Cout] hold W_tap_i (Cout, C)
    # for tap i = 3*(dy+1) + (dx+1); one (9*Cout, C) @ (C, N*HW) matmul per conv.
    w1_stk = jnp.transpose(w1_hwio, (0, 1, 3, 2)).reshape(9 * Cout, Cin)
    w2_stk = jnp.transpose(w2_hwio, (0, 1, 3, 2)).reshape(9 * Cout, Cout)
    return (g1.reshape(Cin, 1), b1.reshape(Cin, 1),
            w1_stk, jnp.transpose(wt), (bt + cb1).reshape(Cout, 1),   # time bias + conv1 bias
            g2.reshape(Cout, 1), b2.reshape(Cout, 1),
            w2_stk, jnp.transpose(wr), (cb2 + br).reshape(Cout, 1))   # conv2 bias + residual bias


def resblock_pallas(x_nchw, time, prepped, *, roll_fwd=-1):
    """x_nchw: (N, Cin, H, W) f32; time: (N, T) f32.  Returns (N, Cout, H, W) f32."""
    (g1c, b1c, w1_stk, wt_t, tb1, g2c, b2c, w2_stk, wr_t, bias2) = prepped
    N, Cin, H, W = x_nchw.shape
    Cout = w1_stk.shape[0] // 9
    HW = H * W

    x = x_nchw.reshape(N, Cin, HW)          # contiguous reshape; no NCHW<->NHWC transpose

    vmem = pl.BlockSpec(memory_space=pltpu.MemorySpace.VMEM)
    # Single invocation, no grid: BatchNorm statistics couple every pixel of the batch,
    # and everything resident here is well under 1 MiB (fits the 32 MiB scoped-VMEM
    # default on v7x as well as v5e/v6e).
    # TODO(synk): at production sizes, shard the grid over N/HW across the two v7x
    #             TensorCores with a two-pass BatchNorm (partial sum/sumsq exchange).
    out = pl.pallas_call(
        functools.partial(resblock_kernel, H=H, W=W, roll_fwd=roll_fwd),
        out_shape=jax.ShapeDtypeStruct((N, Cout, HW), jnp.float32),
        in_specs=[vmem] * 12,
        out_specs=vmem,
    )(x, jnp.transpose(time),
      g1c, b1c, w1_stk, wt_t, tb1, g2c, b2c, w2_stk, wr_t, bias2)

    return out.reshape(N, Cout, H, W)


# ----------------------------- pure-JAX reference ---------------------------
def resblock_ref(x_nchw, time, params):
    (g1, b1, w1_hwio, cb1, wt, bt, g2, b2, w2_hwio, cb2, wr, br) = params
    x = jnp.transpose(x_nchw, (0, 2, 3, 1)).astype(jnp.float32)

    def bn(v, g, b):
        m = jnp.mean(v, axis=(0, 1, 2), keepdims=True)
        var = jnp.mean((v - m) ** 2, axis=(0, 1, 2), keepdims=True)
        return (v - m) / jnp.sqrt(var + EPS) * g.reshape(1, 1, 1, -1) + b.reshape(1, 1, 1, -1)

    def silu(v):
        return v * jax.nn.sigmoid(v)

    h = silu(bn(x, g1, b1))
    h = lax.conv_general_dilated(h, w1_hwio, (1, 1), 'SAME',
                                 dimension_numbers=('NHWC', 'HWIO', 'NHWC'),
                                 precision=lax.Precision.HIGHEST)
    h = h + cb1.reshape(1, 1, 1, -1)
    temb = silu(time) @ wt + bt.reshape(1, -1)
    h = h + temb[:, None, None, :]
    h = silu(bn(h, g2, b2))
    h = lax.conv_general_dilated(h, w2_hwio, (1, 1), 'SAME',
                                 dimension_numbers=('NHWC', 'HWIO', 'NHWC'),
                                 precision=lax.Precision.HIGHEST)
    h = h + cb2.reshape(1, 1, 1, -1)
    res = jnp.einsum('nhwc,cd->nhwd', x, wr, precision=lax.Precision.HIGHEST)
    res = res + br.reshape(1, 1, 1, -1)
    return jnp.transpose(res + h, (0, 3, 1, 2))


if __name__ == "__main__":
    N, Cin, Cout, H, W, T = 2, 4, 8, 16, 16, 32

    key = jax.random.PRNGKey(0)
    ks = jax.random.split(key, 10)

    def unif(k, shape, fan_in):
        bound = 1.0 / math.sqrt(fan_in)
        return jax.random.uniform(k, shape, jnp.float32, -bound, bound)

    # Parameters (PyTorch-style deterministic init, no checkpoint load).
    g1 = jnp.ones((Cin,), jnp.float32)
    b1 = jnp.zeros((Cin,), jnp.float32)
    w1_hwio = unif(ks[0], (3, 3, Cin, Cout), Cin * 9)          # conv1 weight (HWIO)
    cb1 = unif(ks[1], (Cout,), Cin * 9)                        # conv1 bias
    wt = unif(ks[2], (T, Cout), T)                             # time_lin weight (T, Cout)
    bt = unif(ks[3], (Cout,), T)                               # time_lin bias
    g2 = jnp.ones((Cout,), jnp.float32)
    b2 = jnp.zeros((Cout,), jnp.float32)
    w2_hwio = unif(ks[4], (3, 3, Cout, Cout), Cout * 9)        # conv2 weight (HWIO)
    cb2 = unif(ks[5], (Cout,), Cout * 9)                       # conv2 bias
    wr = unif(ks[6], (Cin, Cout), Cin)                         # residual 1x1 conv weight
    br = unif(ks[7], (Cout,), Cin)                             # residual bias
    params = (g1, b1, w1_hwio, cb1, wt, bt, g2, b2, w2_hwio, cb2, wr, br)

    x = jax.random.normal(ks[8], (N, Cin, H, W), jnp.float32)   # NCHW like PyTorch
    time = jax.random.normal(ks[9], (N, T), jnp.float32)

    # One-time setup, outside the forward path: weight repacking + roll-convention probe.
    prepped = prepare_resblock_params(params)
    roll_fwd = _roll_fwd_factor()
    fwd = jax.jit(functools.partial(resblock_pallas, roll_fwd=roll_fwd))

    out = jax.block_until_ready(fwd(x, time, prepped))

    ref = resblock_ref(x, time, params)
    assert out.shape == (N, Cout, H, W)
    err = float(jnp.max(jnp.abs(out - ref)))
    assert jnp.allclose(out, ref, atol=3e-2, rtol=3e-2), err

    print("KERNEL_OK")
</pallas_src>

<mosaic_0001>
module attributes {stable_mosaic.version = 11 : i64} {
  func.func @probe(%arg0: memref<8x256xf32, #tpu.memory_space<vmem>>, %arg1: memref<8x256xf32, #tpu.memory_space<vmem>>) attributes {dimension_semantics = [], scalar_prefetch = 0 : i64, scratch_operands = 0 : i64, tpu.core_type = #tpu.core_type<tc>} {
    %c0 = arith.constant 0 : index
    %c0_0 = arith.constant 0 : index
    %0 = vector.load %arg0[%c0, %c0_0] : memref<8x256xf32, #tpu.memory_space<vmem>>, vector<8x256xf32>
    %c1_i32 = arith.constant 1 : i32
    %1 = tpu.dynamic_rotate %0 by %c1_i32 dim 1 : vector<8x256xf32>, i32 -> vector<8x256xf32>
    %c0_1 = arith.constant 0 : index
    %c0_2 = arith.constant 0 : index
    %2 = vector.load %arg1[%c0_1, %c0_2] : memref<8x256xf32, #tpu.memory_space<vmem>>, vector<8x256xf32>
    tpu.vector_store %arg1[%c0_1, %c0_2], %1 {strides = array<i32>} : memref<8x256xf32, #tpu.memory_space<vmem>>, vector<8x256xf32>,
    return
  }
}

</mosaic_0001>

<llo_original>
// kernel: tpu_custom_call.1
$region0: #{tpu_custom_call.1}
  #allocation0 [shape = 'u32[]', space=smem, size = 0x4, offset = 0x4, fixed_abs, tag = 'smem constant byte address 0x4 - core index']
  #allocation1 [shape = 'u32[72,128]{1,0:T(1,128)}', space=vmem, size = 0x9000, scoped, tag = 'internal scratch']
  %s0 = inlined_call_operand.hbm [shape: f32[8,256], index: 0, kind: input, shape index: {}]
  %s1 = inlined_call_operand.hbm [shape: f32[8,256], index: 1, kind: output, shape index: {}]
  %s2 = sld [smem:[#allocation0]]
  $region18: #{tpu_custom_call.1} parent=0
    _
  %s4 = ssub.s32 1, %s2
  %s5 = scalar_select 0, %s4, %s2
  $region1: #{tpu_custom_call.1} parent=0
    #allocation2 [shape = 'u8[8192]{0}', space=vmem, size = 0x2000, scoped, tag = 'input window, operand 0, single buffered']
    #allocation3 [shape = 's32[1]{0}', space=sflag, size = 0x4, scoped, tag = 'scoped memory for tpu_custom_call.1']
    #allocation4 [shape = 's32[1]{0}', space=sflag, size = 0x4, scoped, tag = 'scoped memory for tpu_custom_call.1']
    #allocation5 [shape = 'u8[8192]{0}', space=vmem, size = 0x2000, scoped, tag = 'output window, operand 0, single buffered']
    %6 = vsyncpa [#allocation3], 0
    %7 = vsyncpa [#allocation4], 0
    // Predicated region
    $region2: #{tpu_custom_call.1} parent=1 // pred_check
      _
    $region3: #{tpu_custom_call.1} parent=1 // pred_check_branch
      %9 = sbr.rel (0) target = $region5
    $region4: #{tpu_custom_call.1} parent=1 // pred_region
      %11 = vsyncadd [#allocation3], 0
      %s13 = sshll.u32 %s0, 4
      %s14 = int_to_ptr.hbm [resolvable:$true] %s13
      %s15 = sshll.u32 [#allocation2], 4
      %s16 = int_to_ptr.vmem [resolvable:$true] %s15
      %18 = dma.hbm_to_vmem [thread:$0]  %s14, 256, %s16, [#allocation3]
    $region5: #{tpu_custom_call.1} parent=1 // pred_fallthru
      _
    // Predicated region
    $region6: #{tpu_custom_call.1} parent=1 // pred_check
      _
    $region7: #{tpu_custom_call.1} parent=1 // pred_check_branch
      %20 = sbr.rel (0) target = $region9
    $region8: #{tpu_custom_call.1} parent=1 // pred_region
      %22 = dma.done [#allocation3], 256
    $region9: #{tpu_custom_call.1} parent=1 // pred_fallthru
      _
    %v23 = vld [vmem:[#allocation2] sm:$0xff]
    %v24 = vld [vmem:[#allocation2 + $0x8] sm:$0xff]
    %25 = vrot.lane.b32.xlu0 %v23, 1
    %v26 = vpop.permute.xlu0 %25
    %27 = vrot.lane.b32.xlu0 %v24, 1
    %v28 = vpop.permute.xlu0 %27
    %v29 = vlaneseq
    %v30 = vand.u32 %v29, 127
    %vm31 = vcmp.lt.s32.totalorder %v30, 1
    %v32 = vsel %vm31, %v26, %v28
    %v33 = vsel %vm31, %v28, %v26
    %34 = vst [vmem:[#allocation5] sm:$0xff] %v33
    %35 = vst [vmem:[#allocation5 + $0x8] sm:$0xff] %v32
    // Predicated region
    $region10: #{tpu_custom_call.1} parent=1 // pred_check
      _
    $region11: #{tpu_custom_call.1} parent=1 // pred_check_branch
      %37 = sbr.rel (0) target = $region13
    $region12: #{tpu_custom_call.1} parent=1 // pred_region
      %39 = vsyncadd [#allocation4], 0
      %s41 = sshll.u32 [#allocation5], 4
      %s42 = int_to_ptr.vmem [resolvable:$true] %s41
      %s43 = sshll.u32 %s1, 4
      %s44 = int_to_ptr.hbm [resolvable:$true] %s43
      %46 = dma.vmem_to_hbm [thread:$0]  %s42, 256, %s44, [#allocation4]
    $region13: #{tpu_custom_call.1} parent=1 // pred_fallthru
      _
    // Predicated region
    $region14: #{tpu_custom_call.1} parent=1 // pred_check
      _
    $region15: #{tpu_custom_call.1} parent=1 // pred_check_branch
      %48 = sbr.rel (0) target = $region17
    $region16: #{tpu_custom_call.1} parent=1 // pred_region
      %50 = dma.done [#allocation4], 256
    $region17: #{tpu_custom_call.1} parent=1 // pred_fallthru
      _
    %51 = vsyncpa [#allocation3], 1
    %52 = vsyncpa [#allocation4], 1

</llo_original>
